<compile_context>
chip_gen: v6e
topology: v6e:2x2x1
jax: 0.10.0
libtpu: 0.0.40
codegen_flags: <defaults>
</compile_context>

<pallas_src>
import jax
import jax.numpy as jnp
from jax import lax
from jax.experimental import pallas as pl
from jax.experimental.pallas import tpu as pltpu

F_IN = 10          # feature width of x1 / BatchNorm1d(10) / fc3 out_features
DIM1 = 4           # the `dim1` hidden size (original script used 1)
BATCH = 8
EPS = 1e-5         # PyTorch BatchNorm1d default eps


def model2_kernel(x_ref, w_ref, b_ref, o_ref):
    """x_ref: (B, F) input; w_ref: (F, F) = M.T; b_ref: (B, F) pre-broadcast
    bias; o_ref: (B, F) output."""
    x = x_ref[...]                                            # (B, F)

    # Training-mode BatchNorm statistics (two-pass variance for stability;
    # (x - mean) is reused for xhat so the cost is identical to one-pass).
    mean = jnp.mean(x, axis=0, keepdims=True)                 # (1, F)
    d = x - mean                                              # (B, F)
    var = jnp.mean(d * d, axis=0, keepdims=True)              # (1, F) biased
    xhat = d * lax.rsqrt(var + EPS)                           # (B, F), EUP rsqrt

    # Folded affine chain: one (B,F)x(F,F) MXU op + plain VPU bias add
    # (bias already broadcast to (B, F) host-side — no sublane broadcast here).
    o_ref[...] = (jnp.dot(xhat, w_ref[...], preferred_element_type=jnp.float32)
                  + b_ref[...])


@jax.jit
def model2_forward(x, params):
    (g1, b1, g2, b2, w1, c1, w2, c2, w3, c3) = params

    # --- Parameter-only folding (exact algebra of the original graph). ---
    # addmm(v4, v5, eye) == v4 + v5  =>  fuse fc1 + fc2.
    w = w1 + w2                                   # (DIM1, 2F)
    c = c1 + c2                                   # (DIM1,)
    wl, wr = w[:, :F_IN], w[:, F_IN:]             # split instead of concat(v1,v2)
    # v6 = xhat @ A.T + d0   with A = Wl*g1 + Wr*g2, d0 = Wl@b1 + Wr@b2 + c
    a = wl * g1[None, :] + wr * g2[None, :]       # (DIM1, F)
    d0 = wl @ b1 + wr @ b2 + c                    # (DIM1,)
    # v7 = v6 @ W3.T + c3 = xhat @ (W3 @ A).T + (W3 @ d0 + c3)
    m_t = (w3 @ a).T                              # (F, F) effective weight, already transposed
    b_eff = w3 @ d0 + c3                          # (F,)   effective bias

    B = x.shape[0]
    bias_full = jnp.broadcast_to(b_eff[None, :], (B, F_IN))   # (B, F) VPU-add-ready

    cost = pl.CostEstimate(
        flops=2 * B * F_IN * F_IN + 6 * B * F_IN,             # matmul + BN stats
        transcendentals=F_IN,                                 # rsqrt per feature
        bytes_accessed=4 * (B * F_IN            # x in
                            + F_IN * F_IN       # weight in
                            + B * F_IN          # bias in
                            + B * F_IN),        # out
    )

    return pl.pallas_call(
        model2_kernel,
        out_shape=jax.ShapeDtypeStruct((B, F_IN), jnp.float32),
        in_specs=[pl.BlockSpec(memory_space=pltpu.MemorySpace.VMEM),
                  pl.BlockSpec(memory_space=pltpu.MemorySpace.VMEM),
                  pl.BlockSpec(memory_space=pltpu.MemorySpace.VMEM)],
        out_specs=pl.BlockSpec(memory_space=pltpu.MemorySpace.VMEM),
        cost_estimate=cost,
    )(x, m_t, bias_full)


def model2_reference(x, params):
    """Pure-JAX op-by-op replica of the original graph (for tolerance check)."""
    (g1, b1, g2, b2, w1, c1, w2, c2, w3, c3) = params
    mean = jnp.mean(x, axis=0, keepdims=True)
    var = jnp.mean((x - mean) ** 2, axis=0, keepdims=True)
    xhat = (x - mean) * lax.rsqrt(var + EPS)
    v1 = xhat * g1 + b1
    v2 = xhat * g2 + b2
    v3 = jnp.concatenate([v1, v2], axis=1)
    v4 = v3 @ w1.T + c1
    v5 = v3 @ w2.T + c2
    v6 = v4 + v5 @ jnp.eye(w1.shape[0], dtype=jnp.float32)   # addmm with eye
    v7 = v6 @ w3.T + c3
    return v7


if __name__ == "__main__":
    key = jax.random.PRNGKey(0)
    kx, k1, k2, k3, k4, k5, k6 = jax.random.split(key, 7)

    # Example input (batch, 10) like x1 = torch.randn(., 10)
    x = jax.random.normal(kx, (BATCH, F_IN), dtype=jnp.float32)

    # Deterministic parameter init (PyTorch-style uniform(-1/sqrt(fan_in), .)).
    lim12 = 1.0 / float((2 * F_IN) ** 0.5)
    w1 = jax.random.uniform(k1, (DIM1, 2 * F_IN), jnp.float32, -lim12, lim12)
    c1 = jax.random.uniform(k2, (DIM1,), jnp.float32, -lim12, lim12)
    w2 = jax.random.uniform(k3, (DIM1, 2 * F_IN), jnp.float32, -lim12, lim12)
    c2 = jax.random.uniform(k4, (DIM1,), jnp.float32, -lim12, lim12)
    lim3 = 1.0 / float(DIM1 ** 0.5)
    w3 = jax.random.uniform(k5, (F_IN, DIM1), jnp.float32, -lim3, lim3)
    c3 = jax.random.uniform(k6, (F_IN,), jnp.float32, -lim3, lim3)

    # BatchNorm affine params: non-trivial values so the folding is exercised.
    g1 = jnp.ones((F_IN,), jnp.float32) * 1.25
    b1 = jnp.full((F_IN,), 0.1, jnp.float32)
    g2 = jnp.ones((F_IN,), jnp.float32) * 0.75
    b2 = jnp.full((F_IN,), -0.2, jnp.float32)

    params = (g1, b1, g2, b2, w1, c1, w2, c2, w3, c3)

    out = model2_forward(x, params)
    jax.block_until_ready(out)
    assert out.shape == (BATCH, F_IN) and out.dtype == jnp.float32

    # Tolerance check against the op-by-op reference (fp reassociation only).
    ref = model2_reference(x, params)
    assert jnp.allclose(out, ref, rtol=1e-5, atol=1e-5), \
        f"max abs diff {jnp.max(jnp.abs(out - ref))}"

    print("KERNEL_OK")
</pallas_src>

<mosaic_0001>
module attributes {stable_mosaic.version = 11 : i64} {
  func.func @model2_kernel(%arg0: memref<8x10xf32, #tpu.memory_space<vmem>>, %arg1: memref<10x10xf32, #tpu.memory_space<vmem>>, %arg2: memref<8x10xf32, #tpu.memory_space<vmem>>, %arg3: memref<8x10xf32, #tpu.memory_space<vmem>>) attributes {dimension_semantics = [], scalar_prefetch = 0 : i64, scratch_operands = 0 : i64, tpu.core_type = #tpu.core_type<tc>} {
    %c0 = arith.constant 0 : index
    %c0_0 = arith.constant 0 : index
    %0 = vector.load %arg0[%c0, %c0_0] : memref<8x10xf32, #tpu.memory_space<vmem>>, vector<8x10xf32>
    %cst = arith.constant dense<0.000000e+00> : vector<10xf32>
    %1 = vector.multi_reduction <add>, %0, %cst [0] : vector<8x10xf32> to vector<10xf32>
    %2 = vector.shape_cast %1 : vector<10xf32> to vector<1x10xf32>
    %cst_1 = arith.constant 8.000000e+00 : f32
    %3 = vector.broadcast %cst_1 : f32 to vector<1x10xf32>
    %4 = arith.divf %2, %3 : vector<1x10xf32>
    %5 = vector.broadcast %4 : vector<1x10xf32> to vector<8x10xf32>
    %6 = arith.subf %0, %5 : vector<8x10xf32>
    %7 = arith.mulf %6, %6 : vector<8x10xf32>
    %cst_2 = arith.constant dense<0.000000e+00> : vector<10xf32>
    %8 = vector.multi_reduction <add>, %7, %cst_2 [0] : vector<8x10xf32> to vector<10xf32>
    %9 = vector.shape_cast %8 : vector<10xf32> to vector<1x10xf32>
    %cst_3 = arith.constant 8.000000e+00 : f32
    %10 = vector.broadcast %cst_3 : f32 to vector<1x10xf32>
    %11 = arith.divf %9, %10 : vector<1x10xf32>
    %cst_4 = arith.constant 9.99999974E-6 : f32
    %12 = vector.broadcast %cst_4 : f32 to vector<1x10xf32>
    %13 = arith.addf %11, %12 : vector<1x10xf32>
    %14 = math.rsqrt %13 : vector<1x10xf32>
    %15 = vector.broadcast %14 : vector<1x10xf32> to vector<8x10xf32>
    %16 = arith.mulf %6, %15 : vector<8x10xf32>
    %c0_5 = arith.constant 0 : index
    %c0_6 = arith.constant 0 : index
    %17 = vector.load %arg1[%c0_5, %c0_6] : memref<10x10xf32, #tpu.memory_space<vmem>>, vector<10x10xf32>
    %cst_7 = arith.constant dense<0.000000e+00> : vector<8x10xf32>
    %18 = tpu.matmul %16, %17, %cst_7 {dimension_numbers = #tpu.dot_dimension_numbers<[1], [0], [0], [1], [0, 0, 1, 1], [], []>} : vector<8x10xf32>, vector<10x10xf32>, vector<8x10xf32> -> vector<8x10xf32>
    %c0_8 = arith.constant 0 : index
    %c0_9 = arith.constant 0 : index
    %19 = vector.load %arg2[%c0_8, %c0_9] : memref<8x10xf32, #tpu.memory_space<vmem>>, vector<8x10xf32>
    %20 = arith.addf %18, %19 : vector<8x10xf32>
    %c0_10 = arith.constant 0 : index
    %c0_11 = arith.constant 0 : index
    %21 = vector.load %arg3[%c0_10, %c0_11] : memref<8x10xf32, #tpu.memory_space<vmem>>, vector<8x10xf32>
    tpu.vector_store %arg3[%c0_10, %c0_11], %20 {strides = array<i32>} : memref<8x10xf32, #tpu.memory_space<vmem>>, vector<8x10xf32>,
    return
  }
}

</mosaic_0001>

<llo_original>
// kernel: model2_forward.1
$region0: #{model2_forward.1}
  #allocation0 [shape = 'u32[]', space=smem, size = 0x4, offset = 0x4, fixed_abs, tag = 'smem constant byte address 0x4 - core index']
  #allocation1 [shape = 'u32[144,128]{1,0:T(1,128)}', space=vmem, size = 0x12000, scoped, tag = 'internal scratch']
  %s0 = inlined_call_operand.vmem [shape: f32[8,10], index: 0, kind: input, shape index: {}]
  %s1 = inlined_call_operand.vmem [shape: f32[10,10], index: 1, kind: input, shape index: {}]
  %s2 = inlined_call_operand.vmem [shape: f32[8,10], index: 2, kind: input, shape index: {}]
  %s3 = inlined_call_operand.hbm [shape: f32[8,10], index: 3, kind: output, shape index: {}]
  %s4 = sld [smem:[#allocation0]]
  $region22: #{model2_forward.1} parent=0
    _
  %s6 = ssub.s32 1, %s4
  %s7 = scalar_select 0, %s6, %s4
  $region1: #{model2_forward.1} parent=0
    #allocation2 [shape = 'u8[4096]{0}', space=vmem, size = 0x1000, scoped, tag = 'output window, operand 0, single buffered']
    #allocation3 [shape = 's32[1]{0}', space=sflag, size = 0x4, scoped, tag = 'scoped memory for model2_forward.1']
    %8 = vsyncpa [#allocation3], 0
    // Predicated region
    $region2: #{model2_forward.1} parent=1 // pred_check
      _
    $region3: #{model2_forward.1} parent=1 // pred_check_branch
      %10 = sbr.rel (0) target = $region5
    $region4: #{model2_forward.1} parent=1 // pred_region
      _
    $region5: #{model2_forward.1} parent=1 // pred_fallthru
      _
    // Predicated region
    $region6: #{model2_forward.1} parent=1 // pred_check
      _
    $region7: #{model2_forward.1} parent=1 // pred_check_branch
      %12 = sbr.rel (0) target = $region9
    $region8: #{model2_forward.1} parent=1 // pred_region
      _
    $region9: #{model2_forward.1} parent=1 // pred_fallthru
      _
    // Predicated region
    $region10: #{model2_forward.1} parent=1 // pred_check
      _
    $region11: #{model2_forward.1} parent=1 // pred_check_branch
      %14 = sbr.rel (0) target = $region13
    $region12: #{model2_forward.1} parent=1 // pred_region
      _
    $region13: #{model2_forward.1} parent=1 // pred_fallthru
      _
    %v15 = vld [vmem:[%s0] sm:$0xff]
    %vm16 = vcmask 80896
    %v17 = vsel %vm16, %v15, 0.0
    %v18 = vrot.slane %v17, 4
    %v19 = vadd.f32 %v17, %v18
    %v20 = vrot.slane %v19, 2
    %v21 = vadd.f32 %v19, %v20
    %v22 = vrot.slane %v21, 1
    %v23 = vadd.f32 %v21, %v22
    %v24 = vrcp.pop 8.0
    %v25 = vmul.f32 %v23, %v24
    %v26 = vsub.f32 %v15, %v25
    %v27 = vmul.f32 %v26, %v26
    %v28 = vsel %vm16, %v27, 0.0
    %v29 = vrot.slane %v28, 4
    %v30 = vadd.f32 %v28, %v29
    %v31 = vrot.slane %v30, 2
    %v32 = vadd.f32 %v30, %v31
    %v33 = vrot.slane %v32, 1
    %v34 = vadd.f32 %v32, %v33
    %v35 = vmul.f32 %v34, %v24
    %v36 = vadd.f32 %v35, 1e-05
    %v37 = vrsqrt.pop %v36
    %v38 = vmul.f32 %v26, %v37
    %v39 = vld [vmem:[%s1] sm:$0xff]
    %v40 = vld [vmem:[%s1 + $0x8] sm:$0x3]
    %v41 = vld [vmem:[%s2] sm:$0xff]
    %v43 = vsel %vm16, %v38, 0
    %vm45 = vcmask 1041408
    %v47 = vsel %vm45, %v40, 0
    %49 = vmatprep.subr.mxu0 0.0
    %50 = vmatpush1.msra.mxu0 0.0
    %51 = vmatprep.subr.mxu0 0.0
    %52 = vmatpush1.msra.mxu0 0.0
    %53 = vmatprep.subr.mxu0 0.0
    %54 = vmatpush1.msra.mxu0 0.0
    %55 = vmatprep.subr.mxu0 0.0
    %56 = vmatpush1.msra.mxu0 0.0
    %57 = vmatprep.subr.mxu0 0.0
    %58 = vmatpush1.msra.mxu0 0.0
    %59 = vmatprep.subr.mxu0 0.0
    %60 = vmatpush1.msra.mxu0 0.0
    %61 = vmatprep.subr.mxu0 0.0
    %62 = vmatpush1.msra.mxu0 0.0
    %63 = vmatprep.subr.mxu0 0.0
    %64 = vmatpush1.msra.mxu0 0.0
    %65 = vmatprep.subr.mxu0 0.0
    %66 = vmatpush1.msra.mxu0 0.0
    %67 = vmatprep.subr.mxu0 0.0
    %68 = vmatpush1.msra.mxu0 0.0
    %69 = vmatprep.subr.mxu0 0.0
    %70 = vmatpush1.msra.mxu0 0.0
    %71 = vmatprep.subr.mxu0 0.0
    %72 = vmatpush1.msra.mxu0 0.0
    %73 = vmatprep.subr.mxu0 0.0
    %74 = vmatpush1.msra.mxu0 0.0
    %75 = vmatprep.subr.mxu0 0.0
    %76 = vmatpush1.msra.mxu0 0.0
    %77 = vmatprep.subr.mxu0 0.0
    %78 = vmatpush1.msra.mxu0 %v47
    %79 = vmatprep.subr.mxu0 0.0
    %80 = vmatpush1.msra.mxu0 %v39
    %81 = vmatprep.subr.mxu0 0.0
    %82 = vmatpush2.msra.mxu0 0.0
    %83 = vmatprep.subr.mxu0 0.0
    %84 = vmatpush2.msra.mxu0 0.0
    %85 = vmatprep.subr.mxu0 0.0
    %86 = vmatpush2.msra.mxu0 0.0
    %87 = vmatprep.subr.mxu0 0.0
    %88 = vmatpush2.msra.mxu0 0.0
    %89 = vmatprep.subr.mxu0 0.0
    %90 = vmatpush2.msra.mxu0 0.0
    %91 = vmatprep.subr.mxu0 0.0
    %92 = vmatpush2.msra.mxu0 0.0
    %93 = vmatprep.subr.mxu0 0.0
    %94 = vmatpush2.msra.mxu0 0.0
    %95 = vmatprep.subr.mxu0 0.0
    %96 = vmatpush2.msra.mxu0 0.0
    %97 = vmatprep.subr.mxu0 0.0
    %98 = vmatpush2.msra.mxu0 0.0
    %99 = vmatprep.subr.mxu0 0.0
    %100 = vmatpush2.msra.mxu0 0.0
    %101 = vmatprep.subr.mxu0 0.0
    %102 = vmatpush2.msra.mxu0 0.0
    %103 = vmatprep.subr.mxu0 0.0
    %104 = vmatpush2.msra.mxu0 0.0
    %105 = vmatprep.subr.mxu0 0.0
    %106 = vmatpush2.msra.mxu0 0.0
    %107 = vmatprep.subr.mxu0 0.0
    %108 = vmatpush2.msra.mxu0 0.0
    %109 = vmatprep.subr.mxu0 0.0
    %110 = vmatpush2.msra.mxu0 0.0
    %111 = vmatprep.subr.mxu0 0.0
    %112 = vmatpush2.msra.mxu0 0.0
    %113 = vmatprep.mubr.f32.mxu0 0.0
    %114 = vmatmul.mubr.f32.gmra.mxu0 %v43
    %v115 = vpop.f32.mrf.mxu0
    %v116 = vadd.f32 %v41, %v115
    %v117 = vpop.f32.mrf.mxu0
    %118 = vdwg.mxu0
    %119 = vst.msk [vmem:[#allocation2] sm:$0xff] %vm16, %v116
    // Predicated region
    $region14: #{model2_forward.1} parent=1 // pred_check
      _
    $region15: #{model2_forward.1} parent=1 // pred_check_branch
      %121 = sbr.rel (0) target = $region17
    $region16: #{model2_forward.1} parent=1 // pred_region
      %s123 = ssub.s32 128, 128
      %124 = vsyncadd [#allocation3], %s123
      %s126 = sshll.u32 [#allocation2], 4
      %s127 = int_to_ptr.vmem [resolvable:$true] %s126
      %129 = dma.vmem_to_hbm [thread:$0]  %s127, 128, %s3, [#allocation3]
    $region17: #{model2_forward.1} parent=1 // pred_fallthru
      _
    // Predicated region
    $region18: #{model2_forward.1} parent=1 // pred_check
      _
    $region19: #{model2_forward.1} parent=1 // pred_check_branch
      %131 = sbr.rel (0) target = $region21
    $region20: #{model2_forward.1} parent=1 // pred_region
      %132 = dma.done [#allocation3], 128
    $region21: #{model2_forward.1} parent=1 // pred_fallthru
      _
    %133 = vsyncpa [#allocation3], 1

</llo_original>
